<compile_context>
chip_gen: v7x
topology: tpu7x:2x2x1
jax: 0.10.0
libtpu: 0.0.40
codegen_flags: <defaults>
</compile_context>

<pallas_src>
import numpy as np
import jax
import jax.numpy as jnp
from jax import lax
from jax.experimental import pallas as pl
from jax.experimental.pallas import tpu as pltpu


def _round_up(x, m):
    return (x + m - 1) // m * m


def _margin_ratio_kernel(pred_ref, khi_ref, klo_ref, out_ref):
    # pred_ref: (C, TB) f32 prediction tile, batch already on lanes.
    # khi_ref, klo_ref: (C, C) bf16 hi/lo planes of 1/(K*||W_c1 - W_c2||),
    #                   zero diagonal; hi + lo reconstructs f32 to ~2^-17 rel.
    # out_ref:  (1, TB) f32 lane-dense per-sample min certified-margin ratio.
    pred = pred_ref[...]                                        # (C, TB)
    C = pred.shape[0]

    # top-1 per sample (first occurrence on ties, matching torch.topk/argmax)
    maxval = jnp.max(pred, axis=0, keepdims=True)               # (1, TB)
    row = lax.broadcasted_iota(jnp.int32, pred.shape, 0)        # class index
    j0 = jnp.min(jnp.where(pred == maxval, row, C),
                 axis=0, keepdims=True)                         # (1, TB)
    mask = row == j0                                            # (C, TB) bool
    onehot = mask.astype(jnp.float32).astype(jnp.bfloat16)      # exact 0/1

    # Gather column j0 of the reciprocal table via one-hot MXU matmuls
    # (table symmetric): sel_inv[c, b] = 1 / (K * ||W_c - W_{j0[b]}||).
    sel_inv = (
        jnp.dot(khi_ref[...], onehot, preferred_element_type=jnp.float32)
        + jnp.dot(klo_ref[...], onehot, preferred_element_type=jnp.float32)
    )                                                           # (C, TB) f32

    # ratio[c, b] = (top1[b] - pred[c, b]) * sel_inv[c, b]; exclude c == j0.
    margins = maxval - pred                                     # (C, TB)
    ratios = jnp.where(mask, jnp.inf, margins * sel_inv)        # (C, TB)
    out_ref[...] = jnp.min(ratios, axis=0, keepdims=True)       # (1, TB)


def _vmem_capacity_bytes():
    # Generation-aware VMEM size; conservative fallback = v7x per-TC (64 MiB).
    try:
        return int(pltpu.get_tpu_info().vmem_capacity_bytes)
    except Exception:
        return 64 << 20


def _pick_tile(B, C, table_bytes, budget_bytes):
    # Real per-row footprint: double-buffered f32 pred tile (2*C*4) plus ~5
    # tile-sized f32 temporaries (mask/onehot, sel_inv, margins, ratios, ...).
    per_row = (2 + 5) * C * 4
    avail = max(budget_bytes - table_bytes, 128 * per_row)
    tb = 2048
    while tb > 128 and tb * per_row > avail:
        tb //= 2
    b_pad128 = _round_up(B, 128)
    tb = min(tb, b_pad128)
    # v7x megacore: guarantee >= 2 grid tiles whenever the batch allows it.
    if b_pad128 >= 256:
        tb = min(tb, (b_pad128 // 2) // 128 * 128)
    return max(tb, 128)


def margin_ratio_distribution(prediction, W, *, K_model, Kfc, data_std,
                              calibrate_outputs=True):
    """Pallas version of MarginRatioDistribution.forward; returns ratios (B,)."""
    data_scaling = 1.0 / float(np.min(np.asarray(data_std)))
    W = jnp.asarray(W, jnp.float32)
    W = W.reshape(W.shape[0], -1)
    if calibrate_outputs:
        # parameter-setup glue (same as torch: W / ||W_row||_2)
        w_norm = jnp.sqrt(jnp.sum(W * W, axis=1, keepdims=True))
        W = W / w_norm
    K = float(K_model) / float(Kfc) * data_scaling

    # Hoisted, batch-independent reciprocal class-pair distance table built
    # with one Gram matmul (no O(C^2*D) broadcasted difference):
    #   kinv[c1, c2] = 1 / (K * ||W_c1 - W_c2||),  diag := 0 (masked in-kernel).
    C = W.shape[0]
    sq = jnp.sum(W * W, axis=1)
    gram = jnp.dot(W, W.T, preferred_element_type=jnp.float32)
    dsq = jnp.maximum(sq[:, None] + sq[None, :] - 2.0 * gram, 0.0)
    kdist = K * jnp.sqrt(dsq)
    eye = jnp.eye(C, dtype=bool)
    # Tiny floor keeps the table finite so 0*inf cannot NaN-poison the MXU
    # gather if two class rows coincide (degenerate case).
    kinv = jnp.where(eye, 0.0,
                     1.0 / jnp.maximum(kdist, jnp.finfo(jnp.float32).tiny))
    # Exact-ish bf16 hi/lo split -> the one-hot gather runs as 2 bf16 MXU passes.
    khi = kinv.astype(jnp.bfloat16)
    klo = (kinv - khi.astype(jnp.float32)).astype(jnp.bfloat16)

    prediction = jnp.asarray(prediction, jnp.float32)
    B = prediction.shape[0]

    vmem_cap = _vmem_capacity_bytes()
    table_bytes = 2 * (C * C * 2)                    # hi + lo bf16, single-buffered
    budget = min(int(0.6 * vmem_cap), 96 << 20)
    TB = _pick_tile(B, C, table_bytes, budget)
    B_pad = _round_up(B, TB)
    if B_pad != B:
        prediction = jnp.pad(prediction, ((0, B_pad - B), (0, 0)))
    pred_cb = prediction.T                           # (C, B_pad): batch on lanes
    num_tiles = B_pad // TB

    cost = pl.CostEstimate(
        flops=int(4 * B_pad * C * C + 10 * B_pad * C),   # 2 bf16 MXU passes + VPU
        transcendentals=0,                               # rsqrt hoisted to wrapper
        bytes_accessed=int(4 * B_pad * C + 4 * C * C + 4 * B_pad),
    )
    vmem_limit = min(int(0.75 * vmem_cap), 100 << 20)    # 48 MiB on v7x fallback

    def build(single_buffer_table):
        if single_buffer_table:
            def tbl_spec():
                return pl.BlockSpec((C, C), lambda i: (0, 0),
                                    pipeline_mode=pl.Buffered(1))
        else:
            def tbl_spec():
                return pl.BlockSpec((C, C), lambda i: (0, 0))
        return pl.pallas_call(
            _margin_ratio_kernel,
            out_shape=jax.ShapeDtypeStruct((1, B_pad), jnp.float32),
            grid_spec=pltpu.PrefetchScalarGridSpec(
                num_scalar_prefetch=0,
                grid=(num_tiles,),
                in_specs=[
                    pl.BlockSpec((C, TB), lambda i: (0, i)),   # prediction tile
                    tbl_spec(),                                # khi, VMEM-resident
                    tbl_spec(),                                # klo, VMEM-resident
                ],
                out_specs=pl.BlockSpec((1, TB), lambda i: (0, i)),  # lane-dense
            ),
            compiler_params=pltpu.CompilerParams(
                dimension_semantics=("parallel",),             # megacore on v7x
                vmem_limit_bytes=vmem_limit,
            ),
            cost_estimate=cost,
        )

    try:
        out = build(True)(pred_cb, khi, klo)
    except Exception:
        # Fallback if this Pallas build rejects pl.Buffered(1) single-buffering.
        out = build(False)(pred_cb, khi, klo)

    # RunningHistogram(ratios).values equivalent:
    return out[0, :B]


def _reference(prediction, W, *, K_model, Kfc, data_std, calibrate_outputs=True):
    """Pure-JAX transcription of the torch forward, for verification."""
    data_scaling = 1.0 / float(np.min(np.asarray(data_std)))
    if calibrate_outputs:
        W = W / jnp.linalg.norm(W.reshape(W.shape[0], -1), axis=1, keepdims=True)
    K = K_model / Kfc * data_scaling
    kW = K * W
    j0 = jnp.argmax(prediction, axis=1)
    kW_j = kW[j0]                                     # (B, D)
    kW_ij = kW_j[:, :, None] - kW.T[None, :, :]       # (B, D, C)
    Kij = jnp.linalg.norm(kW_ij, axis=1)              # (B, C)
    top1 = jnp.max(prediction, axis=1, keepdims=True)
    margins = top1 - prediction
    margins = margins.at[jnp.arange(prediction.shape[0]), j0].set(jnp.inf)
    return jnp.min(margins / Kij, axis=1)


if __name__ == "__main__":
    B, C, D = 8, 16, 32          # batch, num classes, classifier features
    key = jax.random.PRNGKey(0)
    k1, k2 = jax.random.split(key)
    prediction = jax.random.normal(k1, (B, C), dtype=jnp.float32) * 3.0
    W = jax.random.normal(k2, (C, D), dtype=jnp.float32) * 0.1

    params = dict(K_model=6.0, Kfc=2.0,
                  data_std=np.array([0.229, 0.224, 0.225], np.float32),
                  calibrate_outputs=True)
    # TODO(synk): fc.estimate()/model.lipschitz_estimate() power-iteration
    # Lipschitz estimates are model-internal; supplied here as fixed scalars.

    out = margin_ratio_distribution(prediction, W, **params)
    out = jax.block_until_ready(out)

    ref = _reference(prediction, W, **params)
    np.testing.assert_allclose(np.asarray(out), np.asarray(ref),
                               rtol=1e-3, atol=1e-5)
    print("KERNEL_OK")
</pallas_src>

<mosaic_0001>
module attributes {stable_mosaic.version = 11 : i64} {
  func.func @_margin_ratio_kernel(%arg0: i32, %arg1: memref<16x128xf32, #tpu.memory_space<vmem>>, %arg2: memref<16x16xbf16, #tpu.memory_space<vmem>>, %arg3: memref<16x16xbf16, #tpu.memory_space<vmem>>, %arg4: memref<1x128xf32, #tpu.memory_space<vmem>>) attributes {dimension_semantics = [#tpu.dimension_semantics<parallel>], iteration_bounds = array<i64: 1>, scalar_prefetch = 0 : i64, scratch_operands = 0 : i64, tpu.core_type = #tpu.core_type<tc>, window_params = [{transform_indices = @transform_0, window_bounds = array<i64: 16, 128>}, {pipeline_mode = #tpu.pipeline_mode<synchronous>, transform_indices = @transform_1, window_bounds = array<i64: 16, 16>}, {pipeline_mode = #tpu.pipeline_mode<synchronous>, transform_indices = @transform_2, window_bounds = array<i64: 16, 16>}, {transform_indices = @transform_3, window_bounds = array<i64: 1, 128>}]} {
    %c0 = arith.constant 0 : index
    %c0_0 = arith.constant 0 : index
    %0 = vector.load %arg1[%c0, %c0_0] : memref<16x128xf32, #tpu.memory_space<vmem>>, vector<16x128xf32>
    %cst = arith.constant dense<0xFF800000> : vector<128xf32>
    %1 = vector.multi_reduction <maximumf>, %0, %cst [0] : vector<16x128xf32> to vector<128xf32>
    %2 = vector.shape_cast %1 : vector<128xf32> to vector<1x128xf32>
    %3 = tpu.iota {dimensions = array<i32: 0>} : vector<16x128xi32>
    %4 = vector.broadcast %2 : vector<1x128xf32> to vector<16x128xf32>
    %5 = arith.cmpf oeq, %0, %4 : vector<16x128xf32>
    %c16_i32 = arith.constant 16 : i32
    %6 = vector.broadcast %c16_i32 : i32 to vector<16x128xi32>
    %7 = arith.select %5, %3, %6 : vector<16x128xi1>, vector<16x128xi32>
    %cst_1 = arith.constant dense<2147483647> : vector<128xi32>
    %8 = vector.multi_reduction <minsi>, %7, %cst_1 [0] : vector<16x128xi32> to vector<128xi32>
    %9 = vector.shape_cast %8 : vector<128xi32> to vector<1x128xi32>
    %10 = vector.broadcast %9 : vector<1x128xi32> to vector<16x128xi32>
    %11 = arith.cmpi eq, %3, %10 : vector<16x128xi32>
    %12 = arith.extui %11 : vector<16x128xi1> to vector<16x128xi32>
    %13 = arith.sitofp %12 : vector<16x128xi32> to vector<16x128xf32>
    %14 = arith.truncf %13 : vector<16x128xf32> to vector<16x128xbf16>
    %c0_2 = arith.constant 0 : index
    %c0_3 = arith.constant 0 : index
    %15 = vector.load %arg2[%c0_2, %c0_3] : memref<16x16xbf16, #tpu.memory_space<vmem>>, vector<16x16xbf16>
    %cst_4 = arith.constant dense<0.000000e+00> : vector<16x128xf32>
    %16 = tpu.matmul %15, %14, %cst_4 {dimension_numbers = #tpu.dot_dimension_numbers<[1], [0], [0], [1], [0, 0, 1, 1], [], []>} : vector<16x16xbf16>, vector<16x128xbf16>, vector<16x128xf32> -> vector<16x128xf32>
    %c0_5 = arith.constant 0 : index
    %c0_6 = arith.constant 0 : index
    %17 = vector.load %arg3[%c0_5, %c0_6] : memref<16x16xbf16, #tpu.memory_space<vmem>>, vector<16x16xbf16>
    %cst_7 = arith.constant dense<0.000000e+00> : vector<16x128xf32>
    %18 = tpu.matmul %17, %14, %cst_7 {dimension_numbers = #tpu.dot_dimension_numbers<[1], [0], [0], [1], [0, 0, 1, 1], [], []>} : vector<16x16xbf16>, vector<16x128xbf16>, vector<16x128xf32> -> vector<16x128xf32>
    %19 = arith.addf %16, %18 : vector<16x128xf32>
    %20 = vector.broadcast %2 : vector<1x128xf32> to vector<16x128xf32>
    %21 = arith.subf %20, %0 : vector<16x128xf32>
    %22 = arith.mulf %21, %19 : vector<16x128xf32>
    %cst_8 = arith.constant 0x7F800000 : f32
    %23 = vector.broadcast %cst_8 : f32 to vector<16x128xf32>
    %24 = arith.select %11, %23, %22 : vector<16x128xi1>, vector<16x128xf32>
    %cst_9 = arith.constant dense<0x7F800000> : vector<128xf32>
    %25 = vector.multi_reduction <minimumf>, %24, %cst_9 [0] : vector<16x128xf32> to vector<128xf32>
    %26 = vector.shape_cast %25 : vector<128xf32> to vector<1x128xf32>
    %c0_10 = arith.constant 0 : index
    %c0_11 = arith.constant 0 : index
    %27 = vector.load %arg4[%c0_10, %c0_11] : memref<1x128xf32, #tpu.memory_space<vmem>>, vector<1x128xf32>
    tpu.vector_store %arg4[%c0_10, %c0_11], %26 {strides = array<i32>} : memref<1x128xf32, #tpu.memory_space<vmem>>, vector<1x128xf32>,
    return
  }
  func.func @transform_0(%arg0: i32) -> (i32, i32) {
    %c0_i32 = arith.constant 0 : i32
    %c0_i32_0 = arith.constant 0 : i32
    return %c0_i32, %arg0 : i32, i32
  }
  func.func @transform_1(%arg0: i32) -> (i32, i32) {
    %c0_i32 = arith.constant 0 : i32
    %c0_i32_0 = arith.constant 0 : i32
    %c0_i32_1 = arith.constant 0 : i32
    return %c0_i32, %c0_i32_0 : i32, i32
  }
  func.func @transform_2(%arg0: i32) -> (i32, i32) {
    %c0_i32 = arith.constant 0 : i32
    %c0_i32_0 = arith.constant 0 : i32
    %c0_i32_1 = arith.constant 0 : i32
    return %c0_i32, %c0_i32_0 : i32, i32
  }
  func.func @transform_3(%arg0: i32) -> (i32, i32) {
    %c0_i32 = arith.constant 0 : i32
    %c0_i32_0 = arith.constant 0 : i32
    return %c0_i32, %arg0 : i32, i32
  }
}

module attributes {stable_mosaic.version = 11 : i64} {
  func.func @_margin_ratio_kernel(%arg0: i32, %arg1: memref<16x128xf32, #tpu.memory_space<vmem>>, %arg2: memref<16x16xbf16, #tpu.memory_space<vmem>>, %arg3: memref<16x16xbf16, #tpu.memory_space<vmem>>, %arg4: memref<1x128xf32, #tpu.memory_space<vmem>>) attributes {dimension_semantics = [#tpu.dimension_semantics<parallel>], iteration_bounds = array<i64: 1>, scalar_prefetch = 0 : i64, scratch_operands = 0 : i64, tpu.core_type = #tpu.core_type<tc>, window_params = [{transform_indices = @transform_0, window_bounds = array<i64: 16, 128>}, {pipeline_mode = #tpu.pipeline_mode<synchronous>, transform_indices = @transform_1, window_bounds = array<i64: 16, 16>}, {pipeline_mode = #tpu.pipeline_mode<synchronous>, transform_indices = @transform_2, window_bounds = array<i64: 16, 16>}, {transform_indices = @transform_3, window_bounds = array<i64: 1, 128>}]} {
    %c0 = arith.constant 0 : index
    %c0_0 = arith.constant 0 : index
    %0 = vector.load %arg1[%c0, %c0_0] : memref<16x128xf32, #tpu.memory_space<vmem>>, vector<16x128xf32>
    %cst = arith.constant dense<0xFF800000> : vector<128xf32>
    %1 = vector.multi_reduction <maximumf>, %0, %cst [0] : vector<16x128xf32> to vector<128xf32>
    %2 = vector.shape_cast %1 : vector<128xf32> to vector<1x128xf32>
    %3 = tpu.iota {dimensions = array<i32: 0>} : vector<16x128xi32>
    %4 = vector.broadcast %2 : vector<1x128xf32> to vector<16x128xf32>
    %5 = arith.cmpf oeq, %0, %4 : vector<16x128xf32>
    %c16_i32 = arith.constant 16 : i32
    %6 = vector.broadcast %c16_i32 : i32 to vector<16x128xi32>
    %7 = arith.select %5, %3, %6 : vector<16x128xi1>, vector<16x128xi32>
    %cst_1 = arith.constant dense<2147483647> : vector<128xi32>
    %8 = vector.multi_reduction <minsi>, %7, %cst_1 [0] : vector<16x128xi32> to vector<128xi32>
    %9 = vector.shape_cast %8 : vector<128xi32> to vector<1x128xi32>
    %10 = vector.broadcast %9 : vector<1x128xi32> to vector<16x128xi32>
    %11 = arith.cmpi eq, %3, %10 : vector<16x128xi32>
    %12 = arith.extui %11 : vector<16x128xi1> to vector<16x128xi32>
    %13 = arith.sitofp %12 : vector<16x128xi32> to vector<16x128xf32>
    %14 = arith.truncf %13 : vector<16x128xf32> to vector<16x128xbf16>
    %c0_2 = arith.constant 0 : index
    %c0_3 = arith.constant 0 : index
    %15 = vector.load %arg2[%c0_2, %c0_3] : memref<16x16xbf16, #tpu.memory_space<vmem>>, vector<16x16xbf16>
    %cst_4 = arith.constant dense<0.000000e+00> : vector<16x128xf32>
    %16 = tpu.matmul %15, %14, %cst_4 {dimension_numbers = #tpu.dot_dimension_numbers<[1], [0], [0], [1], [0, 0, 1, 1], [], []>} : vector<16x16xbf16>, vector<16x128xbf16>, vector<16x128xf32> -> vector<16x128xf32>
    %c0_5 = arith.constant 0 : index
    %c0_6 = arith.constant 0 : index
    %17 = vector.load %arg3[%c0_5, %c0_6] : memref<16x16xbf16, #tpu.memory_space<vmem>>, vector<16x16xbf16>
    %cst_7 = arith.constant dense<0.000000e+00> : vector<16x128xf32>
    %18 = tpu.matmul %17, %14, %cst_7 {dimension_numbers = #tpu.dot_dimension_numbers<[1], [0], [0], [1], [0, 0, 1, 1], [], []>} : vector<16x16xbf16>, vector<16x128xbf16>, vector<16x128xf32> -> vector<16x128xf32>
    %19 = arith.addf %16, %18 : vector<16x128xf32>
    %20 = vector.broadcast %2 : vector<1x128xf32> to vector<16x128xf32>
    %21 = arith.subf %20, %0 : vector<16x128xf32>
    %22 = arith.mulf %21, %19 : vector<16x128xf32>
    %cst_8 = arith.constant 0x7F800000 : f32
    %23 = vector.broadcast %cst_8 : f32 to vector<16x128xf32>
    %24 = arith.select %11, %23, %22 : vector<16x128xi1>, vector<16x128xf32>
    %cst_9 = arith.constant dense<0x7F800000> : vector<128xf32>
    %25 = vector.multi_reduction <minimumf>, %24, %cst_9 [0] : vector<16x128xf32> to vector<128xf32>
    %26 = vector.shape_cast %25 : vector<128xf32> to vector<1x128xf32>
    %c0_10 = arith.constant 0 : index
    %c0_11 = arith.constant 0 : index
    %27 = vector.load %arg4[%c0_10, %c0_11] : memref<1x128xf32, #tpu.memory_space<vmem>>, vector<1x128xf32>
    tpu.vector_store %arg4[%c0_10, %c0_11], %26 {strides = array<i32>} : memref<1x128xf32, #tpu.memory_space<vmem>>, vector<1x128xf32>,
    return
  }
  func.func @transform_0(%arg0: i32) -> (i32, i32) {
    %c0_i32 = arith.constant 0 : i32
    %c0_i32_0 = arith.constant 0 : i32
    return %c0_i32, %arg0 : i32, i32
  }
  func.func @transform_1(%arg0: i32) -> (i32, i32) {
    %c0_i32 = arith.constant 0 : i32
    %c0_i32_0 = arith.constant 0 : i32
    %c0_i32_1 = arith.constant 0 : i32
    return %c0_i32, %c0_i32_0 : i32, i32
  }
  func.func @transform_2(%arg0: i32) -> (i32, i32) {
    %c0_i32 = arith.constant 0 : i32
    %c0_i32_0 = arith.constant 0 : i32
    %c0_i32_1 = arith.constant 0 : i32
    return %c0_i32, %c0_i32_0 : i32, i32
  }
  func.func @transform_3(%arg0: i32) -> (i32, i32) {
    %c0_i32 = arith.constant 0 : i32
    %c0_i32_0 = arith.constant 0 : i32
    return %c0_i32, %arg0 : i32, i32
  }
}

</mosaic_0001>

<llo_original>
// kernel: tpu_custom_call.1
$region0: #{tpu_custom_call.1}
  #allocation0 [shape = 'u32[]', space=smem, size = 0x4, offset = 0x4, fixed_abs, tag = 'smem constant byte address 0x4 - core index']
  #allocation1 [shape = 'u32[144,128]{1,0:T(1,128)}', space=vmem, size = 0x12000, scoped, tag = 'internal scratch']
  %s0 = inlined_call_operand.hbm [shape: f32[16,128], index: 0, kind: input, shape index: {}]
  %s1 = inlined_call_operand.hbm [shape: bf16[16,16], index: 1, kind: input, shape index: {}]
  %s2 = inlined_call_operand.hbm [shape: bf16[16,16], index: 2, kind: input, shape index: {}]
  %s3 = inlined_call_operand.hbm [shape: f32[1,128], index: 3, kind: output, shape index: {}]
  %s4 = sld [smem:[#allocation0]]
  $region34: #{tpu_custom_call.1} parent=0
    _
  %s6 = ssub.s32 1, %s4
  %s7 = scalar_select 0, %s6, %s4
  $region1: #{tpu_custom_call.1} parent=0
    #allocation2 [shape = 'u8[8192]{0}', space=vmem, size = 0x2000, scoped, tag = 'input window, operand 0, single buffered']
    #allocation3 [shape = 's32[1]{0}', space=sflag, size = 0x4, scoped, tag = 'scoped memory for tpu_custom_call.1']
    #allocation4 [shape = 's32[1]{0}', space=sflag, size = 0x4, scoped, tag = 'scoped memory for tpu_custom_call.1']
    #allocation5 [shape = 'u8[4096]{0}', space=vmem, size = 0x1000, scoped, tag = 'input window, operand 1, single buffered']
    #allocation6 [shape = 's32[1]{0}', space=sflag, size = 0x4, scoped, tag = 'scoped memory for tpu_custom_call.1']
    #allocation7 [shape = 'u8[4096]{0}', space=vmem, size = 0x1000, scoped, tag = 'input window, operand 2, single buffered']
    #allocation8 [shape = 'u8[512]{0}', space=vmem, size = 0x400, scoped, tag = 'output window, operand 0, single buffered']
    %8 = vsyncpa [#allocation3], 0
    %9 = vsyncpa [#allocation6], 0
    %10 = vsyncpa [#allocation4], 0
    // Predicated region
    $region2: #{tpu_custom_call.1} parent=1 // pred_check
      _
    $region3: #{tpu_custom_call.1} parent=1 // pred_check_branch
      %12 = sbr.rel (0) target = $region5
    $region4: #{tpu_custom_call.1} parent=1 // pred_region
      %s14 = ssub.s32 256, 256
      %15 = vsyncadd [#allocation3], %s14
      %s16 = sshll.u32 [#allocation2], 4
      %s17 = int_to_ptr.vmem [resolvable:$true] %s16
      %22 = dma.hbm_to_vmem [thread:$0]  %s0, 256, %s17, [#allocation3], 128, 128, 8
    $region5: #{tpu_custom_call.1} parent=1 // pred_fallthru
      _
    // Predicated region
    $region6: #{tpu_custom_call.1} parent=1 // pred_check
      _
    $region7: #{tpu_custom_call.1} parent=1 // pred_check_branch
      %24 = sbr.rel (0) target = $region9
    $region8: #{tpu_custom_call.1} parent=1 // pred_region
      %s26 = ssub.s32 128, 128
      %27 = vsyncadd [#allocation6], %s26
      %s28 = sshll.u32 [#allocation5], 4
      %s29 = int_to_ptr.vmem [resolvable:$true] %s28
      %34 = dma.hbm_to_vmem [thread:$0]  %s1, 128, %s29, [#allocation6], 64, 64, 4
    $region9: #{tpu_custom_call.1} parent=1 // pred_fallthru
      _
    // Predicated region
    $region10: #{tpu_custom_call.1} parent=1 // pred_check
      _
    $region11: #{tpu_custom_call.1} parent=1 // pred_check_branch
      %36 = sbr.rel (0) target = $region13
    $region12: #{tpu_custom_call.1} parent=1 // pred_region
      %s38 = ssub.s32 128, 128
      %39 = vsyncadd [#allocation6], %s38
      %s40 = sshll.u32 [#allocation7], 4
      %s41 = int_to_ptr.vmem [resolvable:$true] %s40
      %46 = dma.hbm_to_vmem [thread:$0]  %s2, 128, %s41, [#allocation6], 64, 64, 4
    $region13: #{tpu_custom_call.1} parent=1 // pred_fallthru
      _
    // Predicated region
    $region14: #{tpu_custom_call.1} parent=1 // pred_check
      _
    $region15: #{tpu_custom_call.1} parent=1 // pred_check_branch
      %48 = sbr.rel (0) target = $region17
    $region16: #{tpu_custom_call.1} parent=1 // pred_region
      %49 = dma.done [#allocation3], 256
    $region17: #{tpu_custom_call.1} parent=1 // pred_fallthru
      _
    // Predicated region
    $region18: #{tpu_custom_call.1} parent=1 // pred_check
      _
    $region19: #{tpu_custom_call.1} parent=1 // pred_check_branch
      %51 = sbr.rel (0) target = $region21
    $region20: #{tpu_custom_call.1} parent=1 // pred_region
      %52 = dma.done [#allocation6], 128
    $region21: #{tpu_custom_call.1} parent=1 // pred_fallthru
      _
    // Predicated region
    $region22: #{tpu_custom_call.1} parent=1 // pred_check
      _
    $region23: #{tpu_custom_call.1} parent=1 // pred_check_branch
      %54 = sbr.rel (0) target = $region25
    $region24: #{tpu_custom_call.1} parent=1 // pred_region
      %55 = dma.done [#allocation6], 128
    $region25: #{tpu_custom_call.1} parent=1 // pred_fallthru
      _
    %v57 = vld [vmem:[#allocation2] sm:$0xff]
    %v58 = vld [vmem:[#allocation2 + $0x8] sm:$0xff]
    %v59 = vmax.f32 %v57, %v58
    %v60 = vrot.slane %v59, 4
    %v61 = vmax.f32 %v59, %v60
    %v62 = vrot.slane %v61, 2
    %v63 = vmax.f32 %v61, %v62
    %v64 = vrot.slane %v63, 1
    %v65 = vmax.f32 %v63, %v64
    %v66 = vlaneseq
    %v67 = vshrl.u32 %v66, 7
    %v68 = vadd.s32 %v67, 8
    %vm69 = vcmp.eq.f32.partialorder %v57, %v65
    %vm70 = vcmp.eq.f32.partialorder %v58, %v65
    %v71 = vsel %vm69, %v67, 16
    %v72 = vsel %vm70, %v68, 16
    %vm73 = vcmp.lt.s32.totalorder %v71, %v72
    %v74 = vsel %vm73, %v71, %v72
    %v75 = vrot.slane %v74, 4
    %vm76 = vcmp.lt.s32.totalorder %v74, %v75
    %v77 = vsel %vm76, %v74, %v75
    %v78 = vrot.slane %v77, 2
    %vm79 = vcmp.lt.s32.totalorder %v77, %v78
    %v80 = vsel %vm79, %v77, %v78
    %v81 = vrot.slane %v80, 1
    %vm82 = vcmp.lt.s32.totalorder %v80, %v81
    %v83 = vsel %vm82, %v80, %v81
    %vm84 = vcmp.eq.s32.totalorder %v67, %v83
    %vm85 = vcmp.eq.s32.totalorder %v68, %v83
    %v86 = vsel %vm84, 1, 0
    %v87 = vsel %vm85, 1, 0
    %v88 = vcvt.s32.f32 %v86
    %v89 = vcvt.s32.f32 %v87
    %v90 = vpack.c.bf16 %v89, %v88
    %v91 = vld [vmem:[#allocation5] sm:$0xf]
    %v92 = vld [vmem:[#allocation5 + $0x4] sm:$0xf]
    %v93 = vld [vmem:[#allocation7] sm:$0xf]
    %v94 = vld [vmem:[#allocation7 + $0x4] sm:$0xf]
    %v97 = vunpack.c.l.b16 %v93
    %v98 = vunpack.c.l.b16 %v94
    %v99 = vpack.c.b16 %v98, %v97
    %vm100 = vcmask 130048
    %v102 = vsel %vm100, %v99, 0
    %104 = vmatprep.subr.bf16.mxu0 0
    %105 = vmatpush1.bf16.msra.mxu0 %v90
    %106 = vmatprep.subr.bf16.mxu0 0
    %107 = vmatpush1.bf16.msra.mxu0 0
    %108 = vmatprep.subr.bf16.mxu0 0
    %109 = vmatpush1.bf16.msra.mxu0 0
    %110 = vmatprep.subr.bf16.mxu0 0
    %111 = vmatpush1.bf16.msra.mxu0 0
    %112 = vmatprep.subr.bf16.mxu0 0
    %113 = vmatpush1.bf16.msra.mxu0 0
    %114 = vmatprep.subr.bf16.mxu0 0
    %115 = vmatpush1.bf16.msra.mxu0 0
    %116 = vmatprep.subr.bf16.mxu0 0
    %117 = vmatpush1.bf16.msra.mxu0 0
    %118 = vmatprep.subr.bf16.mxu0 0
    %119 = vmatpush1.bf16.msra.mxu0 0
    %120 = vmatprep.subr.bf16.mxu0 0
    %121 = vmatpush1.bf16.msra.mxu0 0
    %122 = vmatprep.subr.bf16.mxu0 0
    %123 = vmatpush1.bf16.msra.mxu0 0
    %124 = vmatprep.subr.bf16.mxu0 0
    %125 = vmatpush1.bf16.msra.mxu0 0
    %126 = vmatprep.subr.bf16.mxu0 0
    %127 = vmatpush1.bf16.msra.mxu0 0
    %128 = vmatprep.subr.bf16.mxu0 0
    %129 = vmatpush1.bf16.msra.mxu0 0
    %130 = vmatprep.subr.bf16.mxu0 0
    %131 = vmatpush1.bf16.msra.mxu0 0
    %132 = vmatprep.subr.bf16.mxu0 0
    %133 = vmatpush1.bf16.msra.mxu0 0
    %134 = vmatprep.subr.bf16.mxu0 0
    %135 = vmatpush1.bf16.msra.mxu0 0
    %136 = vmatprep.mubr.bf16.mxu0 0
    %137 = vmatmul.mubr.bf16.gmra.mrb[0].mxu0 %v102
    %v138 = vpop.f32.mrb[0].mxu0
    %v139 = vadd.f32 0.0, %v138
    %v140 = vpop.f32.mrb[0].mxu0
    %v141 = vpop.f32.mrb[0].mxu0
    %v142 = vadd.f32 0.0, %v141
    %v143 = vpop.f32.mrb[0].mxu0
    %144 = vdwg.mxu0
    %v147 = vunpack.c.l.b16 %v91
    %v148 = vunpack.c.l.b16 %v92
    %v149 = vpack.c.b16 %v148, %v147
    %v151 = vsel %vm100, %v149, 0
    %153 = vmatprep.subr.bf16.mxu0 0
    %154 = vmatpush1.bf16.msra.mxu0 %v90
    %155 = vmatprep.subr.bf16.mxu0 0
    %156 = vmatpush1.bf16.msra.mxu0 0
    %157 = vmatprep.subr.bf16.mxu0 0
    %158 = vmatpush1.bf16.msra.mxu0 0
    %159 = vmatprep.subr.bf16.mxu0 0
    %160 = vmatpush1.bf16.msra.mxu0 0
    %161 = vmatprep.subr.bf16.mxu0 0
    %162 = vmatpush1.bf16.msra.mxu0 0
    %163 = vmatprep.subr.bf16.mxu0 0
    %164 = vmatpush1.bf16.msra.mxu0 0
    %165 = vmatprep.subr.bf16.mxu0 0
    %166 = vmatpush1.bf16.msra.mxu0 0
    %167 = vmatprep.subr.bf16.mxu0 0
    %168 = vmatpush1.bf16.msra.mxu0 0
    %169 = vmatprep.subr.bf16.mxu0 0
    %170 = vmatpush1.bf16.msra.mxu0 0
    %171 = vmatprep.subr.bf16.mxu0 0
    %172 = vmatpush1.bf16.msra.mxu0 0
    %173 = vmatprep.subr.bf16.mxu0 0
    %174 = vmatpush1.bf16.msra.mxu0 0
    %175 = vmatprep.subr.bf16.mxu0 0
    %176 = vmatpush1.bf16.msra.mxu0 0
    %177 = vmatprep.subr.bf16.mxu0 0
    %178 = vmatpush1.bf16.msra.mxu0 0
    %179 = vmatprep.subr.bf16.mxu0 0
    %180 = vmatpush1.bf16.msra.mxu0 0
    %181 = vmatprep.subr.bf16.mxu0 0
    %182 = vmatpush1.bf16.msra.mxu0 0
    %183 = vmatprep.subr.bf16.mxu0 0
    %184 = vmatpush1.bf16.msra.mxu0 0
    %185 = vmatprep.mubr.bf16.mxu0 0
    %186 = vmatmul.mubr.bf16.gmra.mrb[0].mxu0 %v151
    %v187 = vpop.f32.mrb[0].mxu0
    %v188 = vadd.f32 %v139, %v187
    %v189 = vpop.f32.mrb[0].mxu0
    %v190 = vpop.f32.mrb[0].mxu0
    %v191 = vadd.f32 %v142, %v190
    %v192 = vpop.f32.mrb[0].mxu0
    %193 = vdwg.mxu0
    %v194 = vsub.f32 %v65, %v57
    %v195 = vsub.f32 %v65, %v58
    %v196 = vmul.f32 %v194, %v188
    %v197 = vmul.f32 %v195, %v191
    %v198 = vsel %vm84, inf, %v196
    %v199 = vsel %vm85, inf, %v197
    %v200 = vmin.f32 %v198, %v199
    %v201 = vrot.slane %v200, 4
    %v202 = vmin.f32 %v200, %v201
    %v203 = vrot.slane %v202, 2
    %v204 = vmin.f32 %v202, %v203
    %v205 = vrot.slane %v204, 1
    %v206 = vmin.f32 %v204, %v205
    %207 = vst [vmem:[#allocation8] sm:$0x1] %v206
    // Predicated region
    $region26: #{tpu_custom_call.1} parent=1 // pred_check
      _
    $region27: #{tpu_custom_call.1} parent=1 // pred_check_branch
      %209 = sbr.rel (0) target = $region29
    $region28: #{tpu_custom_call.1} parent=1 // pred_region
      %s211 = ssub.s32 16, 16
      %212 = vsyncadd [#allocation4], %s211
      %s214 = sshll.u32 [#allocation8], 4
      %s215 = int_to_ptr.vmem [resolvable:$true] %s214
      %217 = dma.vmem_to_hbm [thread:$0]  %s215, 16, %s3, [#allocation4]
    $region29: #{tpu_custom_call.1} parent=1 // pred_fallthru
      _
    // Predicated region
    $region30: #{tpu_custom_call.1} parent=1 // pred_check
      _
    $region31: #{tpu_custom_call.1} parent=1 // pred_check_branch
      %219 = sbr.rel (0) target = $region33
    $region32: #{tpu_custom_call.1} parent=1 // pred_region
      %220 = dma.done [#allocation4], 16
    $region33: #{tpu_custom_call.1} parent=1 // pred_fallthru
      _
    %221 = vsyncpa [#allocation3], 1
    %222 = vsyncpa [#allocation6], 1
    %223 = vsyncpa [#allocation4], 1

// kernel: tpu_custom_call.1
$region0: #{tpu_custom_call.1}
  #allocation0 [shape = 'u32[]', space=smem, size = 0x4, offset = 0x4, fixed_abs, tag = 'smem constant byte address 0x4 - core index']
  #allocation1 [shape = 'u32[144,128]{1,0:T(1,128)}', space=vmem, size = 0x12000, scoped, tag = 'internal scratch']
  %s0 = inlined_call_operand.hbm [shape: f32[16,128], index: 0, kind: input, shape index: {}]
  %s1 = inlined_call_operand.hbm [shape: bf16[16,16], index: 1, kind: input, shape index: {}]
  %s2 = inlined_call_operand.hbm [shape: bf16[16,16], index: 2, kind: input, shape index: {}]
  %s3 = inlined_call_operand.hbm [shape: f32[1,128], index: 3, kind: output, shape index: {}]
  %s4 = sld [smem:[#allocation0]]
  $region34: #{tpu_custom_call.1} parent=0
    _
  %s6 = ssub.s32 1, %s4
  %s7 = scalar_select 0, %s6, %s4
  $region1: #{tpu_custom_call.1} parent=0
    #allocation2 [shape = 'u8[8192]{0}', space=vmem, size = 0x2000, scoped, tag = 'input window, operand 0, single buffered']
    #allocation3 [shape = 's32[1]{0}', space=sflag, size = 0x4, scoped, tag = 'scoped memory for tpu_custom_call.1']
    #allocation4 [shape = 's32[1]{0}', space=sflag, size = 0x4, scoped, tag = 'scoped memory for tpu_custom_call.1']
    #allocation5 [shape = 'u8[4096]{0}', space=vmem, size = 0x1000, scoped, tag = 'input window, operand 1, single buffered']
    #allocation6 [shape = 's32[1]{0}', space=sflag, size = 0x4, scoped, tag = 'scoped memory for tpu_custom_call.1']
    #allocation7 [shape = 'u8[4096]{0}', space=vmem, size = 0x1000, scoped, tag = 'input window, operand 2, single buffered']
    #allocation8 [shape = 'u8[512]{0}', space=vmem, size = 0x400, scoped, tag = 'output window, operand 0, single buffered']
    %8 = vsyncpa [#allocation3], 0
    %9 = vsyncpa [#allocation6], 0
    %10 = vsyncpa [#allocation4], 0
    // Predicated region
    $region2: #{tpu_custom_call.1} parent=1 // pred_check
      _
    $region3: #{tpu_custom_call.1} parent=1 // pred_check_branch
      %12 = sbr.rel (0) target = $region5
    $region4: #{tpu_custom_call.1} parent=1 // pred_region
      %s14 = ssub.s32 256, 256
      %15 = vsyncadd [#allocation3], %s14
      %s16 = sshll.u32 [#allocation2], 4
      %s17 = int_to_ptr.vmem [resolvable:$true] %s16
      %22 = dma.hbm_to_vmem [thread:$0]  %s0, 256, %s17, [#allocation3], 128, 128, 8
    $region5: #{tpu_custom_call.1} parent=1 // pred_fallthru
      _
    // Predicated region
    $region6: #{tpu_custom_call.1} parent=1 // pred_check
      _
    $region7: #{tpu_custom_call.1} parent=1 // pred_check_branch
      %24 = sbr.rel (0) target = $region9
    $region8: #{tpu_custom_call.1} parent=1 // pred_region
      %s26 = ssub.s32 128, 128
      %27 = vsyncadd [#allocation6], %s26
      %s28 = sshll.u32 [#allocation5], 4
      %s29 = int_to_ptr.vmem [resolvable:$true] %s28
      %34 = dma.hbm_to_vmem [thread:$0]  %s1, 128, %s29, [#allocation6], 64, 64, 4
    $region9: #{tpu_custom_call.1} parent=1 // pred_fallthru
      _
    // Predicated region
    $region10: #{tpu_custom_call.1} parent=1 // pred_check
      _
    $region11: #{tpu_custom_call.1} parent=1 // pred_check_branch
      %36 = sbr.rel (0) target = $region13
    $region12: #{tpu_custom_call.1} parent=1 // pred_region
      %s38 = ssub.s32 128, 128
      %39 = vsyncadd [#allocation6], %s38
      %s40 = sshll.u32 [#allocation7], 4
      %s41 = int_to_ptr.vmem [resolvable:$true] %s40
      %46 = dma.hbm_to_vmem [thread:$0]  %s2, 128, %s41, [#allocation6], 64, 64, 4
    $region13: #{tpu_custom_call.1} parent=1 // pred_fallthru
      _
    // Predicated region
    $region14: #{tpu_custom_call.1} parent=1 // pred_check
      _
    $region15: #{tpu_custom_call.1} parent=1 // pred_check_branch
      %48 = sbr.rel (0) target = $region17
    $region16: #{tpu_custom_call.1} parent=1 // pred_region
      %49 = dma.done [#allocation3], 256
    $region17: #{tpu_custom_call.1} parent=1 // pred_fallthru
      _
    // Predicated region
    $region18: #{tpu_custom_call.1} parent=1 // pred_check
      _
    $region19: #{tpu_custom_call.1} parent=1 // pred_check_branch
      %51 = sbr.rel (0) target = $region21
    $region20: #{tpu_custom_call.1} parent=1 // pred_region
      %52 = dma.done [#allocation6], 128
    $region21: #{tpu_custom_call.1} parent=1 // pred_fallthru
      _
    // Predicated region
    $region22: #{tpu_custom_call.1} parent=1 // pred_check
      _
    $region23: #{tpu_custom_call.1} parent=1 // pred_check_branch
      %54 = sbr.rel (0) target = $region25
    $region24: #{tpu_custom_call.1} parent=1 // pred_region
      %55 = dma.done [#allocation6], 128
    $region25: #{tpu_custom_call.1} parent=1 // pred_fallthru
      _
    %v57 = vld [vmem:[#allocation2] sm:$0xff]
    %v58 = vld [vmem:[#allocation2 + $0x8] sm:$0xff]
    %v59 = vmax.f32 %v57, %v58
    %v60 = vrot.slane %v59, 4
    %v61 = vmax.f32 %v59, %v60
    %v62 = vrot.slane %v61, 2
    %v63 = vmax.f32 %v61, %v62
    %v64 = vrot.slane %v63, 1
    %v65 = vmax.f32 %v63, %v64
    %v66 = vlaneseq
    %v67 = vshrl.u32 %v66, 7
    %v68 = vadd.s32 %v67, 8
    %vm69 = vcmp.eq.f32.partialorder %v57, %v65
    %vm70 = vcmp.eq.f32.partialorder %v58, %v65
    %v71 = vsel %vm69, %v67, 16
    %v72 = vsel %vm70, %v68, 16
    %vm73 = vcmp.lt.s32.totalorder %v71, %v72
    %v74 = vsel %vm73, %v71, %v72
    %v75 = vrot.slane %v74, 4
    %vm76 = vcmp.lt.s32.totalorder %v74, %v75
    %v77 = vsel %vm76, %v74, %v75
    %v78 = vrot.slane %v77, 2
    %vm79 = vcmp.lt.s32.totalorder %v77, %v78
    %v80 = vsel %vm79, %v77, %v78
    %v81 = vrot.slane %v80, 1
    %vm82 = vcmp.lt.s32.totalorder %v80, %v81
    %v83 = vsel %vm82, %v80, %v81
    %vm84 = vcmp.eq.s32.totalorder %v67, %v83
    %vm85 = vcmp.eq.s32.totalorder %v68, %v83
    %v86 = vsel %vm84, 1, 0
    %v87 = vsel %vm85, 1, 0
    %v88 = vcvt.s32.f32 %v86
    %v89 = vcvt.s32.f32 %v87
    %v90 = vpack.c.bf16 %v89, %v88
    %v91 = vld [vmem:[#allocation5] sm:$0xf]
    %v92 = vld [vmem:[#allocation5 + $0x4] sm:$0xf]
    %v93 = vld [vmem:[#allocation7] sm:$0xf]
    %v94 = vld [vmem:[#allocation7 + $0x4] sm:$0xf]
    %v97 = vunpack.c.l.b16 %v93
    %v98 = vunpack.c.l.b16 %v94
    %v99 = vpack.c.b16 %v98, %v97
    %vm100 = vcmask 130048
    %v102 = vsel %vm100, %v99, 0
    %104 = vmatprep.subr.bf16.mxu0 0
    %105 = vmatpush1.bf16.msra.mxu0 %v90
    %106 = vmatprep.subr.bf16.mxu0 0
    %107 = vmatpush1.bf16.msra.mxu0 0
    %108 = vmatprep.subr.bf16.mxu0 0
    %109 = vmatpush1.bf16.msra.mxu0 0
    %110 = vmatprep.subr.bf16.mxu0 0
    %111 = vmatpush1.bf16.msra.mxu0 0
    %112 = vmatprep.subr.bf16.mxu0 0
    %113 = vmatpush1.bf16.msra.mxu0 0
    %114 = vmatprep.subr.bf16.mxu0 0
    %115 = vmatpush1.bf16.msra.mxu0 0
    %116 = vmatprep.subr.bf16.mxu0 0
    %117 = vmatpush1.bf16.msra.mxu0 0
    %118 = vmatprep.subr.bf16.mxu0 0
    %119 = vmatpush1.bf16.msra.mxu0 0
    %120 = vmatprep.subr.bf16.mxu0 0
    %121 = vmatpush1.bf16.msra.mxu0 0
    %122 = vmatprep.subr.bf16.mxu0 0
    %123 = vmatpush1.bf16.msra.mxu0 0
    %124 = vmatprep.subr.bf16.mxu0 0
    %125 = vmatpush1.bf16.msra.mxu0 0
    %126 = vmatprep.subr.bf16.mxu0 0
    %127 = vmatpush1.bf16.msra.mxu0 0
    %128 = vmatprep.subr.bf16.mxu0 0
    %129 = vmatpush1.bf16.msra.mxu0 0
    %130 = vmatprep.subr.bf16.mxu0 0
    %131 = vmatpush1.bf16.msra.mxu0 0
    %132 = vmatprep.subr.bf16.mxu0 0
    %133 = vmatpush1.bf16.msra.mxu0 0
    %134 = vmatprep.subr.bf16.mxu0 0
    %135 = vmatpush1.bf16.msra.mxu0 0
    %136 = vmatprep.mubr.bf16.mxu0 0
    %137 = vmatmul.mubr.bf16.gmra.mrb[0].mxu0 %v102
    %v138 = vpop.f32.mrb[0].mxu0
    %v139 = vadd.f32 0.0, %v138
    %v140 = vpop.f32.mrb[0].mxu0
    %v141 = vpop.f32.mrb[0].mxu0
    %v142 = vadd.f32 0.0, %v141
    %v143 = vpop.f32.mrb[0].mxu0
    %144 = vdwg.mxu0
    %v147 = vunpack.c.l.b16 %v91
    %v148 = vunpack.c.l.b16 %v92
    %v149 = vpack.c.b16 %v148, %v147
    %v151 = vsel %vm100, %v149, 0
    %153 = vmatprep.subr.bf16.mxu0 0
    %154 = vmatpush1.bf16.msra.mxu0 %v90
    %155 = vmatprep.subr.bf16.mxu0 0
    %156 = vmatpush1.bf16.msra.mxu0 0
    %157 = vmatprep.subr.bf16.mxu0 0
    %158 = vmatpush1.bf16.msra.mxu0 0
    %159 = vmatprep.subr.bf16.mxu0 0
    %160 = vmatpush1.bf16.msra.mxu0 0
    %161 = vmatprep.subr.bf16.mxu0 0
    %162 = vmatpush1.bf16.msra.mxu0 0
    %163 = vmatprep.subr.bf16.mxu0 0
    %164 = vmatpush1.bf16.msra.mxu0 0
    %165 = vmatprep.subr.bf16.mxu0 0
    %166 = vmatpush1.bf16.msra.mxu0 0
    %167 = vmatprep.subr.bf16.mxu0 0
    %168 = vmatpush1.bf16.msra.mxu0 0
    %169 = vmatprep.subr.bf16.mxu0 0
    %170 = vmatpush1.bf16.msra.mxu0 0
    %171 = vmatprep.subr.bf16.mxu0 0
    %172 = vmatpush1.bf16.msra.mxu0 0
    %173 = vmatprep.subr.bf16.mxu0 0
    %174 = vmatpush1.bf16.msra.mxu0 0
    %175 = vmatprep.subr.bf16.mxu0 0
    %176 = vmatpush1.bf16.msra.mxu0 0
    %177 = vmatprep.subr.bf16.mxu0 0
    %178 = vmatpush1.bf16.msra.mxu0 0
    %179 = vmatprep.subr.bf16.mxu0 0
    %180 = vmatpush1.bf16.msra.mxu0 0
    %181 = vmatprep.subr.bf16.mxu0 0
    %182 = vmatpush1.bf16.msra.mxu0 0
    %183 = vmatprep.subr.bf16.mxu0 0
    %184 = vmatpush1.bf16.msra.mxu0 0
    %185 = vmatprep.mubr.bf16.mxu0 0
    %186 = vmatmul.mubr.bf16.gmra.mrb[0].mxu0 %v151
    %v187 = vpop.f32.mrb[0].mxu0
    %v188 = vadd.f32 %v139, %v187
    %v189 = vpop.f32.mrb[0].mxu0
    %v190 = vpop.f32.mrb[0].mxu0
    %v191 = vadd.f32 %v142, %v190
    %v192 = vpop.f32.mrb[0].mxu0
    %193 = vdwg.mxu0
    %v194 = vsub.f32 %v65, %v57
    %v195 = vsub.f32 %v65, %v58
    %v196 = vmul.f32 %v194, %v188
    %v197 = vmul.f32 %v195, %v191
    %v198 = vsel %vm84, inf, %v196
    %v199 = vsel %vm85, inf, %v197
    %v200 = vmin.f32 %v198, %v199
    %v201 = vrot.slane %v200, 4
    %v202 = vmin.f32 %v200, %v201
    %v203 = vrot.slane %v202, 2
    %v204 = vmin.f32 %v202, %v203
    %v205 = vrot.slane %v204, 1
    %v206 = vmin.f32 %v204, %v205
    %207 = vst [vmem:[#allocation8] sm:$0x1] %v206
    // Predicated region
    $region26: #{tpu_custom_call.1} parent=1 // pred_check
      _
    $region27: #{tpu_custom_call.1} parent=1 // pred_check_branch
      %209 = sbr.rel (0) target = $region29
    $region28: #{tpu_custom_call.1} parent=1 // pred_region
      %s211 = ssub.s32 16, 16
      %212 = vsyncadd [#allocation4], %s211
      %s214 = sshll.u32 [#allocation8], 4
      %s215 = int_to_ptr.vmem [resolvable:$true] %s214
      %217 = dma.vmem_to_hbm [thread:$0]  %s215, 16, %s3, [#allocation4]
    $region29: #{tpu_custom_call.1} parent=1 // pred_fallthru
      _
    // Predicated region
    $region30: #{tpu_custom_call.1} parent=1 // pred_check
      _
    $region31: #{tpu_custom_call.1} parent=1 // pred_check_branch
      %219 = sbr.rel (0) target = $region33
    $region32: #{tpu_custom_call.1} parent=1 // pred_region
      %220 = dma.done [#allocation4], 16
    $region33: #{tpu_custom_call.1} parent=1 // pred_fallthru
      _
    %221 = vsyncpa [#allocation3], 1
    %222 = vsyncpa [#allocation6], 1
    %223 = vsyncpa [#allocation4], 1

</llo_original>
